<compile_context>
chip_gen: v6e
topology: v6e:2x2x1
jax: 0.10.0
libtpu: 0.0.40
codegen_flags: <defaults>
</compile_context>

<pallas_src>
import numpy as np
import jax
import jax.numpy as jnp
from jax.experimental import pallas as pl
from jax.experimental.pallas import tpu as pltpu


POSE_SCALING_FACTOR = 0.5
LANE_WIDTH = 128


def _identify_feature_groups(feature_names):
    pose, gaze, au = [], [], []
    for i, name in enumerate(feature_names):
        if name.startswith("pose_"):
            pose.append(i)
        elif name.startswith("gaze_"):
            gaze.append(i)
        elif name.startswith("AU"):
            au.append(i)
    return pose, gaze, au


def build_group_tables(feature_names, pose_scaling_factor=POSE_SCALING_FACTOR):
    """Glue / parameter setup (plain numpy).

    group_mat[g, f] = coefficient applied to softmax weight g for feature f
                      (pose row already carries the pose_scaling_factor).
    base[f]         = 1.0 if feature f belongs to no group, else 0.0.
    """
    F = len(feature_names)
    pose, gaze, au = _identify_feature_groups(feature_names)
    group_mat = np.zeros((3, F), dtype=np.float32)
    base = np.ones((F,), dtype=np.float32)
    for i in pose:
        group_mat[0, i] = pose_scaling_factor
        base[i] = 0.0
    for i in gaze:
        group_mat[1, i] = 1.0
        base[i] = 0.0
    for i in au:
        group_mat[2, i] = 1.0
        base[i] = 0.0
    return jnp.asarray(group_mat), jnp.asarray(base)


def _round_up(a, b):
    return ((a + b - 1) // b) * b


def _scale_mul_kernel(scale_ref, x_ref, o_ref):
    # scale_ref: (1, W)  per-lane scale (already includes softmax + pose factor + base)
    # x_ref:     (TR, W) input row tile
    # o_ref:     (TR, W) output row tile
    o_ref[...] = (x_ref[...] * scale_ref[...]).astype(o_ref.dtype)


def feature_group_balancer(x, group_logits, group_mat, base, *, max_tile_rows=1024):
    """x: [B, S, F] -> balanced x, same shape / dtype."""
    B, S, F = x.shape
    dtype = x.dtype
    n = B * S * F

    # --- Hoisted scale computation (tiny; done once in plain JAX, fuses away). ---
    w = jax.nn.softmax(group_logits.astype(jnp.float32))              # (3,)
    scale = jnp.sum(w[:, None] * group_mat, axis=0) + base            # (F,)
    scale = scale.astype(jnp.float32)

    if LANE_WIDTH % F == 0:
        # Lane-dense path: view x as (rows, 128). Since 128 % F == 0, the
        # feature index of lane l is l % F in every row, so tile the scale.
        width = LANE_WIDTH
        reps = width // F
        scale_row = jnp.tile(scale, reps).reshape(1, width)
        rows = pl.cdiv(n, width)
    else:
        # Fallback: keep the feature axis on lanes (block last dim == full F).
        width = F
        scale_row = scale.reshape(1, width)
        rows = B * S

    # Tile sizing: multiples of 8 sublanes, capped so in+out double-buffers
    # stay far below the scoped-VMEM limit on all generations (incl. v7x 64 MiB).
    tile_rows = min(max_tile_rows, _round_up(rows, 8))
    padded_rows = _round_up(rows, tile_rows)

    flat = x.reshape(-1)
    pad = padded_rows * width - n
    if pad:
        flat = jnp.concatenate([flat, jnp.zeros((pad,), dtype=dtype)])
    x2 = flat.reshape(padded_rows, width)

    grid = (padded_rows // tile_rows,)

    out2 = pl.pallas_call(
        _scale_mul_kernel,
        out_shape=jax.ShapeDtypeStruct((padded_rows, width), dtype),
        grid_spec=pltpu.PrefetchScalarGridSpec(
            num_scalar_prefetch=0,
            grid=grid,
            in_specs=[
                pl.BlockSpec((1, width), lambda i: (0, 0)),           # per-lane scale
                pl.BlockSpec((tile_rows, width), lambda i: (i, 0)),   # x row slab
            ],
            out_specs=pl.BlockSpec((tile_rows, width), lambda i: (i, 0)),
        ),
        compiler_params=pltpu.CompilerParams(
            dimension_semantics=("parallel",),
        ),
    )(scale_row, x2)

    return out2.reshape(-1)[:n].reshape(B, S, F)


def _reference(x, group_logits, feature_names):
    """Pure-JAX reference mirroring the PyTorch forward."""
    pose, gaze, au = _identify_feature_groups(feature_names)
    w = jax.nn.softmax(group_logits)
    F = x.shape[-1]
    scale = jnp.ones((F,), dtype=x.dtype)
    if pose:
        scale = scale.at[jnp.array(pose)].set(POSE_SCALING_FACTOR * w[0])
    if gaze:
        scale = scale.at[jnp.array(gaze)].set(w[1])
    if au:
        scale = scale.at[jnp.array(au)].set(w[2])
    return x * scale


if __name__ == "__main__":
    # Deterministic synthetic feature names: 6 pose, 8 gaze, 14 AU, 4 other -> 32 features
    feature_names = (
        [f"pose_{c}" for c in ["Tx", "Ty", "Tz", "Rx", "Ry", "Rz"]]
        + [f"gaze_{i}_{c}" for i in range(2) for c in ["x", "y", "z", "a"]]
        + [f"AU{i:02d}_r" for i in range(1, 15)]
        + ["confidence", "success", "timestamp", "frame"]
    )
    assert len(feature_names) == 32

    B, S, F = 2, 8, len(feature_names)

    key = jax.random.PRNGKey(0)
    x = jax.random.normal(key, (B, S, F), dtype=jnp.float32)

    # nn.Parameter(torch.ones(3)) -- deterministic init matching the module.
    group_logits = jnp.ones((3,), dtype=jnp.float32)

    group_mat, base = build_group_tables(feature_names)

    out = feature_group_balancer(x, group_logits, group_mat, base)
    out = jax.block_until_ready(out)

    ref = _reference(x, group_logits, feature_names)
    np.testing.assert_allclose(np.asarray(out), np.asarray(ref), rtol=1e-5, atol=1e-5)

    print("KERNEL_OK")
</pallas_src>

<mosaic_0001>
module attributes {stable_mosaic.version = 11 : i64} {
  func.func @_scale_mul_kernel(%arg0: i32, %arg1: memref<1x128xf32, #tpu.memory_space<vmem>>, %arg2: memref<8x128xf32, #tpu.memory_space<vmem>>, %arg3: memref<8x128xf32, #tpu.memory_space<vmem>>) attributes {dimension_semantics = [#tpu.dimension_semantics<parallel>], iteration_bounds = array<i64: 1>, scalar_prefetch = 0 : i64, scratch_operands = 0 : i64, tpu.core_type = #tpu.core_type<tc>, window_params = [{pipeline_mode = #tpu.pipeline_mode<synchronous>, transform_indices = @transform_0, window_bounds = array<i64: 1, 128>}, {transform_indices = @transform_1, window_bounds = array<i64: 8, 128>}, {transform_indices = @transform_2, window_bounds = array<i64: 8, 128>}]} {
    %c0 = arith.constant 0 : index
    %c0_0 = arith.constant 0 : index
    %0 = vector.load %arg2[%c0, %c0_0] : memref<8x128xf32, #tpu.memory_space<vmem>>, vector<8x128xf32>
    %c0_1 = arith.constant 0 : index
    %c0_2 = arith.constant 0 : index
    %1 = vector.load %arg1[%c0_1, %c0_2] : memref<1x128xf32, #tpu.memory_space<vmem>>, vector<1x128xf32>
    %2 = vector.broadcast %1 : vector<1x128xf32> to vector<8x128xf32>
    %3 = arith.mulf %0, %2 : vector<8x128xf32>
    %c0_3 = arith.constant 0 : index
    %c0_4 = arith.constant 0 : index
    %4 = vector.load %arg3[%c0_3, %c0_4] : memref<8x128xf32, #tpu.memory_space<vmem>>, vector<8x128xf32>
    tpu.vector_store %arg3[%c0_3, %c0_4], %3 {strides = array<i32>} : memref<8x128xf32, #tpu.memory_space<vmem>>, vector<8x128xf32>,
    return
  }
  func.func @transform_0(%arg0: i32) -> (i32, i32) {
    %c0_i32 = arith.constant 0 : i32
    %c0_i32_0 = arith.constant 0 : i32
    %c0_i32_1 = arith.constant 0 : i32
    return %c0_i32, %c0_i32_0 : i32, i32
  }
  func.func @transform_1(%arg0: i32) -> (i32, i32) {
    %c0_i32 = arith.constant 0 : i32
    %c0_i32_0 = arith.constant 0 : i32
    return %arg0, %c0_i32 : i32, i32
  }
  func.func @transform_2(%arg0: i32) -> (i32, i32) {
    %c0_i32 = arith.constant 0 : i32
    %c0_i32_0 = arith.constant 0 : i32
    return %arg0, %c0_i32 : i32, i32
  }
}

</mosaic_0001>

<llo_original>
// kernel: tpu_custom_call.1
$region0: #{tpu_custom_call.1}
  #allocation0 [shape = 'u32[]', space=smem, size = 0x4, offset = 0x4, fixed_abs, tag = 'smem constant byte address 0x4 - core index']
  #allocation1 [shape = 'u32[144,128]{1,0:T(1,128)}', space=vmem, size = 0x12000, scoped, tag = 'internal scratch']
  %s0 = inlined_call_operand.hbm [shape: f32[1,128], index: 0, kind: input, shape index: {}]
  %s1 = inlined_call_operand.hbm [shape: f32[8,128], index: 1, kind: input, shape index: {}]
  %s2 = inlined_call_operand.hbm [shape: f32[8,128], index: 2, kind: output, shape index: {}]
  %s3 = sld [smem:[#allocation0]]
  $region26: #{tpu_custom_call.1} parent=0
    _
  %s5 = ssub.s32 1, %s3
  %s6 = scalar_select 0, %s5, %s3
  $region1: #{tpu_custom_call.1} parent=0
    #allocation2 [shape = 'u8[512]{0}', space=vmem, size = 0x400, scoped, tag = 'input window, operand 0, single buffered']
    #allocation3 [shape = 's32[1]{0}', space=sflag, size = 0x4, scoped, tag = 'scoped memory for tpu_custom_call.1']
    #allocation4 [shape = 's32[1]{0}', space=sflag, size = 0x4, scoped, tag = 'scoped memory for tpu_custom_call.1']
    #allocation5 [shape = 'u8[4096]{0}', space=vmem, size = 0x1000, scoped, tag = 'input window, operand 1, single buffered']
    #allocation6 [shape = 's32[1]{0}', space=sflag, size = 0x4, scoped, tag = 'scoped memory for tpu_custom_call.1']
    #allocation7 [shape = 'u8[4096]{0}', space=vmem, size = 0x1000, scoped, tag = 'output window, operand 0, single buffered']
    %7 = vsyncpa [#allocation3], 0
    %8 = vsyncpa [#allocation6], 0
    %9 = vsyncpa [#allocation4], 0
    // Predicated region
    $region2: #{tpu_custom_call.1} parent=1 // pred_check
      _
    $region3: #{tpu_custom_call.1} parent=1 // pred_check_branch
      %11 = sbr.rel (0) target = $region5
    $region4: #{tpu_custom_call.1} parent=1 // pred_region
      %s13 = ssub.s32 16, 16
      %14 = vsyncadd [#allocation3], %s13
      %s16 = sshll.u32 [#allocation2], 4
      %s17 = int_to_ptr.vmem [resolvable:$true] %s16
      %19 = dma.hbm_to_vmem [thread:$0]  %s0, 16, %s17, [#allocation3]
    $region5: #{tpu_custom_call.1} parent=1 // pred_fallthru
      _
    // Predicated region
    $region6: #{tpu_custom_call.1} parent=1 // pred_check
      _
    $region7: #{tpu_custom_call.1} parent=1 // pred_check_branch
      %21 = sbr.rel (0) target = $region9
    $region8: #{tpu_custom_call.1} parent=1 // pred_region
      %s23 = ssub.s32 128, 128
      %24 = vsyncadd [#allocation6], %s23
      %s26 = sshll.u32 [#allocation5], 4
      %s27 = int_to_ptr.vmem [resolvable:$true] %s26
      %29 = dma.hbm_to_vmem [thread:$0]  %s1, 128, %s27, [#allocation6]
    $region9: #{tpu_custom_call.1} parent=1 // pred_fallthru
      _
    // Predicated region
    $region10: #{tpu_custom_call.1} parent=1 // pred_check
      _
    $region11: #{tpu_custom_call.1} parent=1 // pred_check_branch
      %31 = sbr.rel (0) target = $region13
    $region12: #{tpu_custom_call.1} parent=1 // pred_region
      %32 = dma.done [#allocation3], 16
    $region13: #{tpu_custom_call.1} parent=1 // pred_fallthru
      _
    // Predicated region
    $region14: #{tpu_custom_call.1} parent=1 // pred_check
      _
    $region15: #{tpu_custom_call.1} parent=1 // pred_check_branch
      %34 = sbr.rel (0) target = $region17
    $region16: #{tpu_custom_call.1} parent=1 // pred_region
      %35 = dma.done [#allocation6], 128
    $region17: #{tpu_custom_call.1} parent=1 // pred_fallthru
      _
    %v36 = vld [vmem:[#allocation5] sm:$0xff]
    %v37 = vld [vmem:[#allocation2] sm:$0x1]
    %v39 = vlaneseq
    %v40 = vshrl.u32 %v39, 7
    %v41 = vsub.s32 0, %v40
    %v42 = vrot.slane %v37, %v41
    %v44 = vmul.f32 %v36, %v42
    %45 = vst [vmem:[#allocation7] sm:$0xff] %v44
    // Predicated region
    $region18: #{tpu_custom_call.1} parent=1 // pred_check
      _
    $region19: #{tpu_custom_call.1} parent=1 // pred_check_branch
      %47 = sbr.rel (0) target = $region21
    $region20: #{tpu_custom_call.1} parent=1 // pred_region
      %s49 = ssub.s32 128, 128
      %50 = vsyncadd [#allocation4], %s49
      %s52 = sshll.u32 [#allocation7], 4
      %s53 = int_to_ptr.vmem [resolvable:$true] %s52
      %55 = dma.vmem_to_hbm [thread:$0]  %s53, 128, %s2, [#allocation4]
    $region21: #{tpu_custom_call.1} parent=1 // pred_fallthru
      _
    // Predicated region
    $region22: #{tpu_custom_call.1} parent=1 // pred_check
      _
    $region23: #{tpu_custom_call.1} parent=1 // pred_check_branch
      %57 = sbr.rel (0) target = $region25
    $region24: #{tpu_custom_call.1} parent=1 // pred_region
      %58 = dma.done [#allocation4], 128
    $region25: #{tpu_custom_call.1} parent=1 // pred_fallthru
      _
    %59 = vsyncpa [#allocation3], 1
    %60 = vsyncpa [#allocation6], 1
    %61 = vsyncpa [#allocation4], 1

</llo_original>
